<compile_context>
chip_gen: v5e
topology: v5e:2x2
jax: 0.10.0
libtpu: 0.0.40
codegen_flags: <defaults>
</compile_context>

<pallas_src>
import math

import jax
import jax.numpy as jnp
from jax import lax
from jax.experimental import pallas as pl
from jax.experimental.pallas import tpu as pltpu

EPS = 1e-12  # F.normalize default eps


def _round_up(x: int, m: int) -> int:
    return ((x + m - 1) // m) * m


def _vmem_budget_bytes() -> int:
    """~3/4 of physical VMEM, capped at 96 MiB.

    -> 96 MiB on v5e/v6e (128 MiB physical), 48 MiB on v7x (64 MiB physical).
    Falls back to a v7x-safe 48 MiB if the query is unavailable.
    """
    cap = 64 * 1024 * 1024
    try:
        info = pltpu.get_tpu_info()
        cap = int(getattr(info, "vmem_capacity_bytes", cap) or cap)
    except Exception:
        pass
    return int(min(cap * 3 // 4, 96 * 1024 * 1024))


def _tile_bytes(tm: int, tn: int, D: int, out_bytes: int) -> int:
    """Double-buffered VMEM footprint of one grid step's tiles."""
    per = (tm * D * 2          # bf16 x tile
           + D * tn * 2        # bf16 w^T tile
           + tm * tn * out_bytes
           + (tm + tn) * 4)    # f32 row/col scales
    return 2 * per


def cosine_classifier_kernel(x_ref, wt_ref, rs_ref, cs_ref, o_ref):
    """One (tm, tn) output tile: eta * cos_sim = (x @ w^T) * row_scale * col_scale.

    x_ref  : VMEM (tm, D)  bfloat16
    wt_ref : VMEM (D, tn)  bfloat16   (weight pre-transposed -> lane-dense RHS)
    rs_ref : VMEM (tm, 1)  float32    (eta * rsqrt(||x||^2), eps-clamped)
    cs_ref : VMEM (1, tn)  float32    (rsqrt(||w||^2), eps-clamped)
    o_ref  : VMEM (tm, tn) out dtype
    """
    y = jnp.dot(x_ref[...], wt_ref[...], preferred_element_type=jnp.float32)
    o_ref[...] = (y * rs_ref[...] * cs_ref[...]).astype(o_ref.dtype)


def prepare_weight(weight, *, tn=512):
    """Preprocess the classifier weight: col scales + transpose + bf16 + pad.

    Hoist this out of the per-step path (cache the result) when the weight is
    a reused parameter -- it costs a full HBM pass over the weight.
    Returns (w_t_bf16 [D, Cp], col_scale [1, Cp] f32, C, tn).
    """
    C, D = weight.shape
    tn = min(tn, _round_up(C, 128))
    Cp = _round_up(C, tn)
    w32 = weight.astype(jnp.float32)
    # rsqrt(max(ss, eps^2)) == 1 / max(||w||, eps)  (F.normalize semantics).
    col_scale = lax.rsqrt(jnp.maximum(jnp.sum(w32 * w32, axis=1), EPS * EPS))
    w_t = jnp.transpose(w32).astype(jnp.bfloat16)  # [D, C], lane-dense RHS
    if Cp != C:
        w_t = jnp.pad(w_t, ((0, 0), (0, Cp - C)))
        col_scale = jnp.pad(col_scale, (0, Cp - C))  # padded cols: scale 0 -> output 0
    return w_t, col_scale.reshape(1, Cp).astype(jnp.float32), C, tn


def cosine_classifier(x, weight=None, eta=1.0, *, tm=512, tn=512,
                      out_dtype=jnp.float32, prepared_weight=None):
    """x: [B, D], weight: [C, D], eta: scalar/[1]  ->  [B, C] (out_dtype)."""
    B, D = x.shape
    if prepared_weight is None:
        assert weight is not None
        prepared_weight = prepare_weight(weight, tn=tn)
    w_t, col_scale, C, tn = prepared_weight
    Cp = w_t.shape[1]
    assert w_t.shape[0] == D, "feature dims must match"

    budget = _vmem_budget_bytes()
    out_bytes = jnp.dtype(out_dtype).itemsize

    # Batch tile: sublane-aligned, shrunk only if the VMEM budget demands it.
    tm = min(tm, _round_up(B, 8))
    while _tile_bytes(tm, tn, D, out_bytes) > budget and tm > 8:
        tm = max(8, tm // 2)
    # TODO(synk): for very large input_dim where even tm=8 blows the VMEM
    # budget, add a K grid axis (last, "arbitrary") with an f32 accumulator.

    Bp = _round_up(B, tm)

    # Row scales with eta folded in (computed once, not per output tile).
    eta = jnp.asarray(eta, jnp.float32).reshape(-1)[0]
    x32 = x.astype(jnp.float32)
    row_scale = eta * lax.rsqrt(
        jnp.maximum(jnp.sum(x32 * x32, axis=1, keepdims=True), EPS * EPS))
    x_bf = x32.astype(jnp.bfloat16)
    if Bp != B:
        x_bf = jnp.pad(x_bf, ((0, Bp - B), (0, 0)))
        row_scale = jnp.pad(row_scale, ((0, Bp - B), (0, 0)))  # padded rows: scale 0

    grid = (Bp // tm, Cp // tn)
    out = pl.pallas_call(
        cosine_classifier_kernel,
        out_shape=jax.ShapeDtypeStruct((Bp, Cp), out_dtype),
        grid=grid,
        in_specs=[
            pl.BlockSpec((tm, D), lambda i, j: (i, 0)),   # bf16 x tile (resident over j)
            pl.BlockSpec((D, tn), lambda i, j: (0, j)),   # bf16 w^T tile
            pl.BlockSpec((tm, 1), lambda i, j: (i, 0)),   # f32 row scale (eta folded)
            pl.BlockSpec((1, tn), lambda i, j: (0, j)),   # f32 col scale
        ],
        out_specs=pl.BlockSpec((tm, tn), lambda i, j: (i, j)),
        compiler_params=pltpu.CompilerParams(
            dimension_semantics=("parallel", "parallel"),  # megacore sharding on v7x
            vmem_limit_bytes=budget,                       # 96 MiB v5e/v6e, 48 MiB v7x
        ),
    )(x_bf, w_t, row_scale, col_scale)
    return out[:B, :C]


def reference(x, weight, eta):
    xn = x / jnp.maximum(jnp.linalg.norm(x, axis=1, keepdims=True), EPS)
    wn = weight / jnp.maximum(jnp.linalg.norm(weight, axis=1, keepdims=True), EPS)
    return jnp.asarray(eta).reshape(-1)[0] * (xn @ wn.T)


if __name__ == "__main__":
    # Small shapes consistent with the module: batch=8, input_dim=32, n_classes=16.
    B, D, C = 8, 32, 16
    key = jax.random.PRNGKey(0)
    kx, kw = jax.random.split(key)

    x = jax.random.normal(kx, (B, D), dtype=jnp.float32)
    # Deterministic param init mirroring module __init__:
    #   weight ~ U(-stdv, stdv), stdv = 1/sqrt(input_dim); eta = 1
    stdv = 1.0 / math.sqrt(D)
    weight = jax.random.uniform(kw, (C, D), dtype=jnp.float32, minval=-stdv, maxval=stdv)
    eta = jnp.ones((1,), dtype=jnp.float32)

    y = jax.block_until_ready(cosine_classifier(x, weight, eta))
    y_ref = reference(x, weight, eta)
    assert y.shape == (B, C)
    # bf16 MXU operands -> loosened tolerance vs the f32 reference.
    assert jnp.allclose(y, y_ref, atol=1e-2, rtol=1e-2), "mismatch vs reference (small)"

    # Exercise the multi-tile grid + padding + hoisted prepare_weight path.
    B2, D2, C2 = 384, 128, 640
    kx2, kw2 = jax.random.split(jax.random.PRNGKey(1))
    x2 = jax.random.normal(kx2, (B2, D2), dtype=jnp.float32)
    w2 = jax.random.uniform(kw2, (C2, D2), dtype=jnp.float32, minval=-1.0, maxval=1.0)
    prep = prepare_weight(w2)  # cached once; reused across forward calls
    y2 = jax.block_until_ready(cosine_classifier(x2, eta=eta, prepared_weight=prep))
    y2_ref = reference(x2, w2, eta)
    assert y2.shape == (B2, C2)
    assert jnp.allclose(y2, y2_ref, atol=2e-2, rtol=2e-2), "mismatch vs reference (tiled)"

    print("KERNEL_OK")
</pallas_src>

<mosaic_0001>
module attributes {stable_mosaic.version = 11 : i64} {
  func.func @cosine_classifier_kernel(%arg0: i32, %arg1: i32, %arg2: memref<8x32xbf16, #tpu.memory_space<vmem>>, %arg3: memref<32x128xbf16, #tpu.memory_space<vmem>>, %arg4: memref<8x1xf32, #tpu.memory_space<vmem>>, %arg5: memref<1x128xf32, #tpu.memory_space<vmem>>, %arg6: memref<8x128xf32, #tpu.memory_space<vmem>>) attributes {dimension_semantics = [#tpu.dimension_semantics<parallel>, #tpu.dimension_semantics<parallel>], iteration_bounds = array<i64: 1, 1>, scalar_prefetch = 0 : i64, scratch_operands = 0 : i64, tpu.core_type = #tpu.core_type<tc>, window_params = [{transform_indices = @transform_0, window_bounds = array<i64: 8, 32>}, {transform_indices = @transform_1, window_bounds = array<i64: 32, 128>}, {transform_indices = @transform_2, window_bounds = array<i64: 8, 1>}, {transform_indices = @transform_3, window_bounds = array<i64: 1, 128>}, {transform_indices = @transform_4, window_bounds = array<i64: 8, 128>}]} {
    %c0 = arith.constant 0 : index
    %c0_0 = arith.constant 0 : index
    %0 = vector.load %arg2[%c0, %c0_0] : memref<8x32xbf16, #tpu.memory_space<vmem>>, vector<8x32xbf16>
    %c0_1 = arith.constant 0 : index
    %c0_2 = arith.constant 0 : index
    %1 = vector.load %arg3[%c0_1, %c0_2] : memref<32x128xbf16, #tpu.memory_space<vmem>>, vector<32x128xbf16>
    %cst = arith.constant dense<0.000000e+00> : vector<8x128xf32>
    %2 = tpu.matmul %0, %1, %cst {dimension_numbers = #tpu.dot_dimension_numbers<[1], [0], [0], [1], [0, 0, 1, 1], [], []>} : vector<8x32xbf16>, vector<32x128xbf16>, vector<8x128xf32> -> vector<8x128xf32>
    %c0_3 = arith.constant 0 : index
    %c0_4 = arith.constant 0 : index
    %3 = vector.load %arg4[%c0_3, %c0_4] : memref<8x1xf32, #tpu.memory_space<vmem>>, vector<8x1xf32>
    %4 = vector.broadcast %3 : vector<8x1xf32> to vector<8x128xf32>
    %5 = arith.mulf %2, %4 : vector<8x128xf32>
    %c0_5 = arith.constant 0 : index
    %c0_6 = arith.constant 0 : index
    %6 = vector.load %arg5[%c0_5, %c0_6] : memref<1x128xf32, #tpu.memory_space<vmem>>, vector<1x128xf32>
    %7 = vector.broadcast %6 : vector<1x128xf32> to vector<8x128xf32>
    %8 = arith.mulf %5, %7 : vector<8x128xf32>
    %c0_7 = arith.constant 0 : index
    %c0_8 = arith.constant 0 : index
    %9 = vector.load %arg6[%c0_7, %c0_8] : memref<8x128xf32, #tpu.memory_space<vmem>>, vector<8x128xf32>
    tpu.vector_store %arg6[%c0_7, %c0_8], %8 {strides = array<i32>} : memref<8x128xf32, #tpu.memory_space<vmem>>, vector<8x128xf32>,
    return
  }
  func.func @transform_0(%arg0: i32, %arg1: i32) -> (i32, i32) {
    %c0_i32 = arith.constant 0 : i32
    %c0_i32_0 = arith.constant 0 : i32
    return %arg0, %c0_i32 : i32, i32
  }
  func.func @transform_1(%arg0: i32, %arg1: i32) -> (i32, i32) {
    %c0_i32 = arith.constant 0 : i32
    %c0_i32_0 = arith.constant 0 : i32
    return %c0_i32, %arg1 : i32, i32
  }
  func.func @transform_2(%arg0: i32, %arg1: i32) -> (i32, i32) {
    %c0_i32 = arith.constant 0 : i32
    %c0_i32_0 = arith.constant 0 : i32
    return %arg0, %c0_i32 : i32, i32
  }
  func.func @transform_3(%arg0: i32, %arg1: i32) -> (i32, i32) {
    %c0_i32 = arith.constant 0 : i32
    %c0_i32_0 = arith.constant 0 : i32
    return %c0_i32, %arg1 : i32, i32
  }
  func.func @transform_4(%arg0: i32, %arg1: i32) -> (i32, i32) {
    %c0_i32 = arith.constant 0 : i32
    return %arg0, %arg1 : i32, i32
  }
}

</mosaic_0001>

<llo_original>
// kernel: tpu_custom_call.1
$region0: #{tpu_custom_call.1}
  #allocation0 [shape = 'u32[]', space=smem, size = 0x4, offset = 0x4, fixed_abs, tag = 'smem constant byte address 0x4 - core index']
  #allocation1 [shape = 'u32[72,128]{1,0:T(1,128)}', space=vmem, size = 0x9000, scoped, tag = 'internal scratch']
  %s0 = inlined_call_operand.vmem [shape: bf16[8,32], index: 0, kind: input, shape index: {}]
  %s1 = inlined_call_operand.hbm [shape: bf16[32,128], index: 1, kind: input, shape index: {}]
  %s2 = inlined_call_operand.vmem [shape: f32[8,1], index: 2, kind: input, shape index: {}]
  %s3 = inlined_call_operand.vmem [shape: f32[1,128], index: 3, kind: input, shape index: {}]
  %s4 = inlined_call_operand.hbm [shape: f32[8,128], index: 4, kind: output, shape index: {}]
  %s5 = sld [smem:[#allocation0]]
  $region30: #{tpu_custom_call.1} parent=0
    _
  %s7 = ssub.s32 1, %s5
  %s8 = scalar_select 0, %s7, %s5
  $region1: #{tpu_custom_call.1} parent=0
    #allocation2 [shape = 'u8[8192]{0}', space=vmem, size = 0x2000, scoped, tag = 'input window, operand 1, single buffered']
    #allocation3 [shape = 's32[1]{0}', space=sflag, size = 0x4, scoped, tag = 'scoped memory for tpu_custom_call.1']
    #allocation4 [shape = 's32[1]{0}', space=sflag, size = 0x4, scoped, tag = 'scoped memory for tpu_custom_call.1']
    #allocation5 [shape = 'u8[4096]{0}', space=vmem, size = 0x1000, scoped, tag = 'output window, operand 0, single buffered']
    %9 = vsyncpa [#allocation3], 0
    %10 = vsyncpa [#allocation4], 0
    // Predicated region
    $region2: #{tpu_custom_call.1} parent=1 // pred_check
      _
    $region3: #{tpu_custom_call.1} parent=1 // pred_check_branch
      %12 = sbr.rel (0) target = $region5
    $region4: #{tpu_custom_call.1} parent=1 // pred_region
      _
    $region5: #{tpu_custom_call.1} parent=1 // pred_fallthru
      _
    // Predicated region
    $region6: #{tpu_custom_call.1} parent=1 // pred_check
      _
    $region7: #{tpu_custom_call.1} parent=1 // pred_check_branch
      %14 = sbr.rel (0) target = $region9
    $region8: #{tpu_custom_call.1} parent=1 // pred_region
      %16 = vsyncadd [#allocation3], 0
      %s17 = sshll.u32 %s1, 4
      %s18 = int_to_ptr.hbm [resolvable:$true] %s17
      %s19 = sshll.u32 [#allocation2], 4
      %s20 = int_to_ptr.vmem [resolvable:$true] %s19
      %25 = dma.hbm_to_vmem [thread:$0]  %s18, 256, %s20, [#allocation3], 64, 64, 4
    $region9: #{tpu_custom_call.1} parent=1 // pred_fallthru
      _
    // Predicated region
    $region10: #{tpu_custom_call.1} parent=1 // pred_check
      _
    $region11: #{tpu_custom_call.1} parent=1 // pred_check_branch
      %27 = sbr.rel (0) target = $region13
    $region12: #{tpu_custom_call.1} parent=1 // pred_region
      _
    $region13: #{tpu_custom_call.1} parent=1 // pred_fallthru
      _
    // Predicated region
    $region14: #{tpu_custom_call.1} parent=1 // pred_check
      _
    $region15: #{tpu_custom_call.1} parent=1 // pred_check_branch
      %29 = sbr.rel (0) target = $region17
    $region16: #{tpu_custom_call.1} parent=1 // pred_region
      _
    $region17: #{tpu_custom_call.1} parent=1 // pred_fallthru
      _
    // Predicated region
    $region18: #{tpu_custom_call.1} parent=1 // pred_check
      _
    $region19: #{tpu_custom_call.1} parent=1 // pred_check_branch
      %31 = sbr.rel (0) target = $region21
    $region20: #{tpu_custom_call.1} parent=1 // pred_region
      %33 = dma.done [#allocation3], 256
    $region21: #{tpu_custom_call.1} parent=1 // pred_fallthru
      _
    %v35 = vld [vmem:[%s0] sm:$0xf]
    %v36 = vld [vmem:[#allocation2] sm:$0xf]
    %v37 = vld [vmem:[#allocation2 + $0x4] sm:$0xf]
    %v38 = vld [vmem:[#allocation2 + $0x8] sm:$0xf]
    %v39 = vld [vmem:[#allocation2 + $0xc] sm:$0xf]
    %v44 = vunpack.c.l.b16 %v36
    %v45 = vunpack.c.l.b16 %v37
    %v46 = vunpack.c.l.b16 %v38
    %v47 = vunpack.c.l.b16 %v39
    %v48 = vpack.c.b16 %v45, %v44
    %v49 = vpack.c.b16 %v47, %v46
    %vm52 = vcmask 261120
    %v54 = vsel %vm52, %v35, 0
    %56 = vmatpush.bf16.msra.mxu0 0
    %57 = vmatpush.bf16.msra.mxu0 0
    %58 = vmatpush.bf16.msra.mxu0 0
    %59 = vmatpush.bf16.msra.mxu0 0
    %60 = vmatpush.bf16.msra.mxu0 0
    %61 = vmatpush.bf16.msra.mxu0 0
    %62 = vmatpush.bf16.msra.mxu0 %v49
    %63 = vmatpush.bf16.msra.mxu0 %v48
    %64 = vmatmul.bf16.gmra.mxu0 %v54
    %v65 = vpop.f32.mrf.mxu0
    %v66 = vadd.f32 0.0, %v65
    %v67 = vpop.f32.mrf.mxu0
    %68 = vdwg.mxu0
    %v69 = vld [vmem:[%s2] sm:$0xff]
    %71 = vset.pattern.permute.xlu0 0
    %72 = vperm.xlu0 %71, %v69
    %v73 = vpop.permute.xlu0 %72
    %v75 = vmul.f32 %v66, %v73
    %v76 = vld [vmem:[%s3] sm:$0x1]
    %v78 = vperm.slane %v76, 0
    %v80 = vmul.f32 %v75, %v78
    %81 = vst [vmem:[#allocation5] sm:$0xff] %v80
    // Predicated region
    $region22: #{tpu_custom_call.1} parent=1 // pred_check
      _
    $region23: #{tpu_custom_call.1} parent=1 // pred_check_branch
      %83 = sbr.rel (0) target = $region25
    $region24: #{tpu_custom_call.1} parent=1 // pred_region
      %85 = vsyncadd [#allocation4], 0
      %s87 = sshll.u32 [#allocation5], 4
      %s88 = int_to_ptr.vmem [resolvable:$true] %s87
      %s89 = sshll.u32 %s4, 4
      %s90 = int_to_ptr.hbm [resolvable:$true] %s89
      %92 = dma.vmem_to_hbm [thread:$0]  %s88, 128, %s90, [#allocation4]
    $region25: #{tpu_custom_call.1} parent=1 // pred_fallthru
      _
    // Predicated region
    $region26: #{tpu_custom_call.1} parent=1 // pred_check
      _
    $region27: #{tpu_custom_call.1} parent=1 // pred_check_branch
      %94 = sbr.rel (0) target = $region29
    $region28: #{tpu_custom_call.1} parent=1 // pred_region
      %96 = dma.done [#allocation4], 128
    $region29: #{tpu_custom_call.1} parent=1 // pred_fallthru
      _
    %97 = vsyncpa [#allocation3], 1
    %98 = vsyncpa [#allocation4], 1

</llo_original>
